<compile_context>
chip_gen: v7x
topology: tpu7x:2x2x1
jax: 0.10.0
libtpu: 0.0.40
codegen_flags: <defaults>
</compile_context>

<pallas_src>
import functools

import jax
import jax.numpy as jnp
from jax import lax
from jax.experimental import pallas as pl
from jax.experimental.pallas import tpu as pltpu


def _sublane_step(dtype):
    """Sublane packing granularity for the row (second-minor) axis."""
    size = jnp.dtype(dtype).itemsize
    if size >= 4:
        return 8
    if size == 2:
        return 16
    return 32


def _pick_tile(n, want, step):
    """Largest multiple of `step` that divides n and is <= want.

    Falls back to the full dimension n (always layout-legal), so the (8, 128)
    block constraints are always satisfiable.
    """
    cap = min(want, n)
    best = 0
    d = step
    while d <= cap:
        if n % d == 0:
            best = d
        d += step
    return best if best else n


def _chip_info():
    """(vmem_capacity_bytes, tensorcores_per_device) with safe fallbacks."""
    vmem_cap = 128 << 20
    num_tc = 1
    try:
        info = pltpu.get_tpu_info()
        vmem_cap = int(getattr(info, "vmem_capacity_bytes", vmem_cap))
    except Exception:
        pass
    try:
        kind = jax.devices()[0].device_kind.lower()
        # v7x exposes 2 TensorCores per device; v4/v5p megacore likewise.
        if "v7" in kind or "7x" in kind or "v4" in kind or "v5p" in kind:
            num_tc = 2
    except Exception:
        pass
    return vmem_cap, num_tc


def _simpo_lm_head_kernel(tgt_ref, x_ref, w_ref, logp_ref, lsum_ref,
                          m_sc, l_sc, t_sc, s_sc, *, tv):
    j = pl.program_id(1)

    @pl.when(j == 0)
    def _():
        m_sc[...] = jnp.full_like(m_sc, -jnp.inf)
        l_sc[...] = jnp.zeros_like(l_sc)
        t_sc[...] = jnp.zeros_like(t_sc)
        s_sc[...] = jnp.zeros_like(s_sc)

    # (tm, tv) f32 logits: contract x (tm, H) with W-tile (tv, H) on H.
    # (RHS contracted on its last dim -- no per-step transpose of the W tile.)
    logits = lax.dot_general(
        x_ref[...], w_ref[...],
        dimension_numbers=(((1,), (1,)), ((), ())),
        preferred_element_type=jnp.float32)

    # Online logsumexp over the vocab axis.
    m_prev = m_sc[...]
    m_new = jnp.maximum(m_prev, logits.max(axis=-1, keepdims=True))
    l_sc[...] = (l_sc[...] * jnp.exp(m_prev - m_new)
                 + jnp.exp(logits - m_new).sum(axis=-1, keepdims=True))
    m_sc[...] = m_new

    # Gather the logit at the target id (ignore_index=-100 never matches -> 0).
    # NOTE: labels outside [0, V) other than -100 silently give logp = -lse;
    # the input contract must guarantee valid ids.
    col = lax.broadcasted_iota(jnp.int32, logits.shape, 1) + j * tv
    hit = col == tgt_ref[...]
    t_sc[...] += jnp.sum(jnp.where(hit, logits, 0.0), axis=-1, keepdims=True)

    # Row-sum of logits (for the chosen/rejected logits-mean aux outputs).
    s_sc[...] += jnp.sum(logits, axis=-1, keepdims=True)

    @pl.when(j == pl.num_programs(1) - 1)
    def _():
        lse = m_sc[...] + jnp.log(l_sc[...])
        logp_ref[...] = t_sc[...] - lse
        lsum_ref[...] = s_sc[...]


def fused_linear_simpo_loss(weight, x, y, bias=None, *, ignore_index=-100,
                            beta=0.1, alpha=1.0, gamma=0.5,
                            tm=1024, tv=512, w_buffers=None,
                            compute_dtype=None):
    """Forward of LigerFusedLinearSimPOLoss (compute_nll_loss=False default)."""
    assert bias is None  # module default bias=False; # TODO(synk): bias path

    if compute_dtype is not None:
        weight = weight.astype(compute_dtype)
        x = x.astype(compute_dtype)
    elif x.dtype != weight.dtype:
        # torch.nn.Linear requires matching dtypes; follow the weight's dtype
        # (bf16 weights -> bf16 streaming at the full bf16 MXU rate).
        x = x.astype(weight.dtype)

    B, T, H = x.shape
    V = weight.shape[0]
    BT = B * T

    x_item = jnp.dtype(x.dtype).itemsize
    w_item = jnp.dtype(weight.dtype).itemsize
    step_m = _sublane_step(x.dtype)

    vmem_cap, num_tc = _chip_info()
    budget = int(0.85 * vmem_cap)

    # Clamp the tiles to divisors of the actual problem (keeps tiny shapes
    # runnable; real LM-head shapes keep the requested MXU-scale tiles).
    tm = _pick_tile(BT, tm, step_m)
    tv = _pick_tile(V, tv, 128)

    # Multi-TC devices (v7x / megacore): keep the row-tile count a multiple of
    # the core count so the "parallel" row axis load-balances across cores.
    # On 1-TC chips (v5e/v6e) leave tm alone -- shrinking it only adds weight
    # restream traffic.
    if (num_tc > 1 and (BT // tm) % num_tc != 0
            and tm % (num_tc * step_m) == 0):
        tm //= num_tc

    n_w_buf = w_buffers if (w_buffers is not None and w_buffers > 2) else 2

    def _vmem_est(tm_, tv_):
        # x is single-buffered once its tile is large: its block index only
        # changes at a row-tile boundary (once every V/tv grid steps).
        n_x = 1 if tm_ * H * x_item >= (1 << 20) else 2
        return (n_x * tm_ * H * x_item           # x stream
                + n_w_buf * tv_ * H * w_item     # W stream (double-buffered)
                + 6 * tm_ * tv_ * 4              # f32 logits + exp/iota/mask temps
                + 2 * 2 * tm_ * 4                # targets (int32, double-buffered)
                + 12 * tm_ * 4                   # outputs + 4 scratch accumulators
                + (4 << 20))                     # compiler-internal headroom

    # Shrink tiles until they fit this chip's VMEM (v7x: 64 MiB per TC).
    # Prefer shrinking tm; keep tv=512 feeding the MXU N axis as long as
    # possible (tv does not change HBM traffic, tm does).
    while _vmem_est(tm, tv) > budget:
        if tm > 256 and (tm // 2) % step_m == 0 and BT % (tm // 2) == 0:
            tm //= 2
        elif tv > 128 and (tv // 2) % 128 == 0 and V % (tv // 2) == 0:
            tv //= 2
        else:
            break
    assert BT % tm == 0 and V % tv == 0

    x2 = x.reshape(BT, H)
    tgt = y.reshape(BT, 1).astype(jnp.int32)

    vmem_limit = int(min(max(_vmem_est(tm, tv), 32 << 20), budget))

    cost = pl.CostEstimate(
        flops=2 * BT * V * H,
        transcendentals=BT * V,  # one exp per logit
        bytes_accessed=(BT * H * x_item                  # activations
                        + (BT // tm) * V * H * w_item    # W re-streamed per row tile
                        + BT * 4                         # targets
                        + 2 * BT * 4))                   # two f32 outputs

    single_buffer_x = tm * H * x_item >= (1 << 20)
    x_spec_kwargs = {"pipeline_mode": pl.Buffered(1)} if single_buffer_x else {}
    x_spec = pl.BlockSpec((tm, H), lambda i, j: (i, 0), **x_spec_kwargs)

    w_spec_kwargs = {}
    if w_buffers is not None and w_buffers > 2:
        # Deeper buffering on the only per-step-changing operand (only worth it
        # if xprof shows exposed W DMA; not needed on compute-bound v5e).
        w_spec_kwargs["pipeline_mode"] = pl.Buffered(w_buffers)
    w_spec = pl.BlockSpec((tv, H), lambda i, j: (j, 0), **w_spec_kwargs)

    kernel = functools.partial(_simpo_lm_head_kernel, tv=tv)
    per_tok_logp, row_logit_sum = pl.pallas_call(
        kernel,
        out_shape=(jax.ShapeDtypeStruct((BT, 1), jnp.float32),
                   jax.ShapeDtypeStruct((BT, 1), jnp.float32)),
        grid_spec=pltpu.PrefetchScalarGridSpec(
            num_scalar_prefetch=0,
            grid=(BT // tm, V // tv),
            in_specs=[pl.BlockSpec((tm, 1), lambda i, j: (i, 0)),   # targets
                      x_spec,                                       # x rows
                      w_spec],                                      # W tile
            out_specs=[pl.BlockSpec((tm, 1), lambda i, j: (i, 0)),
                       pl.BlockSpec((tm, 1), lambda i, j: (i, 0))],
            scratch_shapes=[pltpu.VMEM((tm, 1), jnp.float32),   # running max
                            pltpu.VMEM((tm, 1), jnp.float32),   # running sum exp
                            pltpu.VMEM((tm, 1), jnp.float32),   # target logit
                            pltpu.VMEM((tm, 1), jnp.float32)]), # row logit sum
        compiler_params=pltpu.CompilerParams(
            dimension_semantics=("parallel", "arbitrary"),
            vmem_limit_bytes=vmem_limit),
        cost_estimate=cost,
    )(tgt, x2, weight)

    per_tok_logp = per_tok_logp.reshape(B, T)
    row_logit_sum = row_logit_sum.reshape(B, T)

    mask = (y != ignore_index)
    # SimPO uses length-normalized (average) log-prob per sequence.
    avg_logp = jnp.sum(per_tok_logp * mask, axis=-1) / jnp.sum(mask, axis=-1)
    half = B // 2
    chosen_logps, rejected_logps = avg_logp[:half], avg_logp[half:]
    denom = half * T * V  # Liger averages over the full chosen/rejected chunk
    chosen_logits_mean = row_logit_sum[:half].sum() / denom
    rejected_logits_mean = row_logit_sum[half:].sum() / denom

    # SimPO preference loss: -log sigmoid(beta*(cl - rl) - gamma), mean over pairs.
    pref_logits = beta * (chosen_logps - rejected_logps) - gamma
    preference_loss = jax.nn.log_sigmoid(pref_logits).sum() / half
    nll_loss = jnp.float32(0.0)  # compute_nll_loss=False (Liger SimPO default)
    loss = alpha * nll_loss - preference_loss

    aux = (chosen_logps, rejected_logps, chosen_logits_mean,
           rejected_logits_mean, nll_loss)
    return loss, aux


class LigerLMHeadSimPO:
    """JAX/Pallas port of the torch module (forward only, bias=False)."""

    def __init__(self, H, V, dtype=jnp.float32, bias=False,
                 ignore_index=-100, beta=0.1, alpha=1.0, gamma=0.5, key=None):
        assert not bias
        key = jax.random.PRNGKey(0) if key is None else key
        bound = 1.0 / (H ** 0.5)
        self.weight = jax.random.uniform(key, (V, H), dtype=jnp.float32,
                                         minval=-bound, maxval=bound).astype(dtype)
        self.ignore_index, self.beta, self.alpha, self.gamma = (
            ignore_index, beta, alpha, gamma)

    def __call__(self, x, y):
        return fused_linear_simpo_loss(
            self.weight, x, y, None, ignore_index=self.ignore_index,
            beta=self.beta, alpha=self.alpha, gamma=self.gamma)


def _reference(weight, x, y, ignore_index=-100, beta=0.1, alpha=1.0, gamma=0.5):
    B, T, H = x.shape
    logits = (x.reshape(-1, H).astype(jnp.float32)
              @ weight.T.astype(jnp.float32))
    lse = jax.scipy.special.logsumexp(logits, axis=-1)
    mask = (y != ignore_index)
    label = jnp.where(mask, y, 0).reshape(-1)
    tgt_logit = logits[jnp.arange(B * T), label]
    per_tok = (tgt_logit - lse).reshape(B, T)
    avg_logp = jnp.sum(per_tok * mask, axis=-1) / jnp.sum(mask, axis=-1)
    half = B // 2
    pref = beta * (avg_logp[:half] - avg_logp[half:]) - gamma
    return -(jax.nn.log_sigmoid(pref).sum() / half)


if __name__ == "__main__":
    # Small shapes: batch pairs b=2 -> B=4 sequences (2 chosen + 2 rejected).
    B, T, H, V = 4, 8, 32, 256
    key = jax.random.PRNGKey(0)
    kx, ky, kw = jax.random.split(key, 3)

    x = jax.random.normal(kx, (B, T, H), dtype=jnp.float32)
    y = jax.random.randint(ky, (B, T), 0, V, dtype=jnp.int32)
    y = y.at[:, -1].set(-100)  # some ignored tokens

    # f32 path: strict check against the pure-JAX reference.
    model = LigerLMHeadSimPO(H, V, dtype=jnp.float32, bias=False, key=kw)
    loss, aux = model(x, y)
    loss = jax.block_until_ready(loss)
    jax.block_until_ready(aux)
    ref_loss = _reference(model.weight, x, y)
    assert jnp.allclose(loss, ref_loss, rtol=1e-5, atol=1e-5), (loss, ref_loss)

    # bf16 streaming path (the dtype real LM-heads use); f32 MXU accumulator,
    # looser tolerance on the rounded operands.
    model_bf16 = LigerLMHeadSimPO(H, V, dtype=jnp.bfloat16, bias=False, key=kw)
    loss16, aux16 = model_bf16(x.astype(jnp.bfloat16), y)
    loss16 = jax.block_until_ready(loss16)
    jax.block_until_ready(aux16)
    ref16 = _reference(model_bf16.weight, x.astype(jnp.bfloat16), y)
    assert jnp.allclose(loss16, ref16, rtol=5e-3, atol=5e-3), (loss16, ref16)

    print("KERNEL_OK")
</pallas_src>

<mosaic_0001>
module attributes {stable_mosaic.version = 11 : i64} {
  func.func @_simpo_lm_head_kernel(%arg0: i32, %arg1: i32, %arg2: memref<32x1xi32, #tpu.memory_space<vmem>>, %arg3: memref<32x32xf32, #tpu.memory_space<vmem>>, %arg4: memref<256x32xf32, #tpu.memory_space<vmem>>, %arg5: memref<32x1xf32, #tpu.memory_space<vmem>>, %arg6: memref<32x1xf32, #tpu.memory_space<vmem>>, %arg7: memref<32x1xf32, #tpu.memory_space<vmem>>, %arg8: memref<32x1xf32, #tpu.memory_space<vmem>>, %arg9: memref<32x1xf32, #tpu.memory_space<vmem>>, %arg10: memref<32x1xf32, #tpu.memory_space<vmem>>) attributes {dimension_semantics = [#tpu.dimension_semantics<parallel>, #tpu.dimension_semantics<arbitrary>], iteration_bounds = array<i64: 1, 1>, scalar_prefetch = 0 : i64, scratch_operands = 4 : i64, tpu.core_type = #tpu.core_type<tc>, window_params = [{transform_indices = @transform_0, window_bounds = array<i64: 32, 1>}, {transform_indices = @transform_1, window_bounds = array<i64: 32, 32>}, {transform_indices = @transform_2, window_bounds = array<i64: 256, 32>}, {transform_indices = @transform_3, window_bounds = array<i64: 32, 1>}, {transform_indices = @transform_4, window_bounds = array<i64: 32, 1>}]} {
    %c0_i32 = arith.constant 0 : i32
    %0 = arith.cmpi eq, %arg1, %c0_i32 : i32
    %1 = arith.extui %0 : i1 to i32
    %c0_i32_0 = arith.constant 0 : i32
    %2 = arith.cmpi ne, %1, %c0_i32_0 : i32
    scf.if %2 {
      %cst_29 = arith.constant 0xFF800000 : f32
      %44 = vector.broadcast %cst_29 : f32 to vector<32x1xf32>
      %c0_30 = arith.constant 0 : index
      %c0_31 = arith.constant 0 : index
      %45 = vector.load %arg7[%c0_30, %c0_31] : memref<32x1xf32, #tpu.memory_space<vmem>>, vector<32x1xf32>
      tpu.vector_store %arg7[%c0_30, %c0_31], %44 {strides = array<i32>} : memref<32x1xf32, #tpu.memory_space<vmem>>, vector<32x1xf32>,
      %cst_32 = arith.constant 0.000000e+00 : f32
      %46 = vector.broadcast %cst_32 : f32 to vector<32x1xf32>
      %c0_33 = arith.constant 0 : index
      %c0_34 = arith.constant 0 : index
      %47 = vector.load %arg8[%c0_33, %c0_34] : memref<32x1xf32, #tpu.memory_space<vmem>>, vector<32x1xf32>
      tpu.vector_store %arg8[%c0_33, %c0_34], %46 {strides = array<i32>} : memref<32x1xf32, #tpu.memory_space<vmem>>, vector<32x1xf32>,
      %cst_35 = arith.constant 0.000000e+00 : f32
      %48 = vector.broadcast %cst_35 : f32 to vector<32x1xf32>
      %c0_36 = arith.constant 0 : index
      %c0_37 = arith.constant 0 : index
      %49 = vector.load %arg9[%c0_36, %c0_37] : memref<32x1xf32, #tpu.memory_space<vmem>>, vector<32x1xf32>
      tpu.vector_store %arg9[%c0_36, %c0_37], %48 {strides = array<i32>} : memref<32x1xf32, #tpu.memory_space<vmem>>, vector<32x1xf32>,
      %cst_38 = arith.constant 0.000000e+00 : f32
      %50 = vector.broadcast %cst_38 : f32 to vector<32x1xf32>
      %c0_39 = arith.constant 0 : index
      %c0_40 = arith.constant 0 : index
      %51 = vector.load %arg10[%c0_39, %c0_40] : memref<32x1xf32, #tpu.memory_space<vmem>>, vector<32x1xf32>
      tpu.vector_store %arg10[%c0_39, %c0_40], %50 {strides = array<i32>} : memref<32x1xf32, #tpu.memory_space<vmem>>, vector<32x1xf32>,
    } else {
    }
    %c0 = arith.constant 0 : index
    %c0_1 = arith.constant 0 : index
    %3 = vector.load %arg3[%c0, %c0_1] : memref<32x32xf32, #tpu.memory_space<vmem>>, vector<32x32xf32>
    %c0_2 = arith.constant 0 : index
    %c0_3 = arith.constant 0 : index
    %4 = vector.load %arg4[%c0_2, %c0_3] : memref<256x32xf32, #tpu.memory_space<vmem>>, vector<256x32xf32>
    %cst = arith.constant dense<0.000000e+00> : vector<32x256xf32>
    %5 = tpu.matmul %3, %4, %cst {dimension_numbers = #tpu.dot_dimension_numbers<[1], [1], [0], [0], [0, 0, 1, 0], [], []>} : vector<32x32xf32>, vector<256x32xf32>, vector<32x256xf32> -> vector<32x256xf32>
    %c0_4 = arith.constant 0 : index
    %c0_5 = arith.constant 0 : index
    %6 = vector.load %arg7[%c0_4, %c0_5] : memref<32x1xf32, #tpu.memory_space<vmem>>, vector<32x1xf32>
    %cst_6 = arith.constant dense<0xFF800000> : vector<32xf32>
    %7 = vector.multi_reduction <maximumf>, %5, %cst_6 [1] : vector<32x256xf32> to vector<32xf32>
    %8 = vector.shape_cast %7 : vector<32xf32> to vector<32x1xf32>
    %9 = arith.maximumf %6, %8 : vector<32x1xf32>
    %c0_7 = arith.constant 0 : index
    %c0_8 = arith.constant 0 : index
    %10 = vector.load %arg8[%c0_7, %c0_8] : memref<32x1xf32, #tpu.memory_space<vmem>>, vector<32x1xf32>
    %11 = arith.subf %6, %9 : vector<32x1xf32>
    %12 = math.exp %11 : vector<32x1xf32>
    %13 = arith.mulf %10, %12 : vector<32x1xf32>
    %14 = vector.broadcast %9 : vector<32x1xf32> to vector<32x256xf32>
    %15 = arith.subf %5, %14 : vector<32x256xf32>
    %16 = math.exp %15 : vector<32x256xf32>
    %cst_9 = arith.constant dense<0.000000e+00> : vector<32xf32>
    %17 = vector.multi_reduction <add>, %16, %cst_9 [1] : vector<32x256xf32> to vector<32xf32>
    %18 = vector.shape_cast %17 : vector<32xf32> to vector<32x1xf32>
    %19 = arith.addf %13, %18 : vector<32x1xf32>
    %c0_10 = arith.constant 0 : index
    %c0_11 = arith.constant 0 : index
    %20 = vector.load %arg8[%c0_10, %c0_11] : memref<32x1xf32, #tpu.memory_space<vmem>>, vector<32x1xf32>
    tpu.vector_store %arg8[%c0_10, %c0_11], %19 {strides = array<i32>} : memref<32x1xf32, #tpu.memory_space<vmem>>, vector<32x1xf32>,
    %c0_12 = arith.constant 0 : index
    %c0_13 = arith.constant 0 : index
    %21 = vector.load %arg7[%c0_12, %c0_13] : memref<32x1xf32, #tpu.memory_space<vmem>>, vector<32x1xf32>
    tpu.vector_store %arg7[%c0_12, %c0_13], %9 {strides = array<i32>} : memref<32x1xf32, #tpu.memory_space<vmem>>, vector<32x1xf32>,
    %22 = tpu.iota {dimensions = array<i32: 1>} : vector<32x256xi32>
    %c256_i32 = arith.constant 256 : i32
    %23 = arith.muli %arg1, %c256_i32 : i32
    %24 = vector.broadcast %23 : i32 to vector<32x256xi32>
    %25 = arith.addi %22, %24 : vector<32x256xi32>
    %c0_14 = arith.constant 0 : index
    %c0_15 = arith.constant 0 : index
    %26 = vector.load %arg2[%c0_14, %c0_15] : memref<32x1xi32, #tpu.memory_space<vmem>>, vector<32x1xi32>
    %27 = vector.broadcast %26 : vector<32x1xi32> to vector<32x256xi32>
    %28 = arith.cmpi eq, %25, %27 : vector<32x256xi32>
    %c0_16 = arith.constant 0 : index
    %c0_17 = arith.constant 0 : index
    %29 = vector.load %arg9[%c0_16, %c0_17] : memref<32x1xf32, #tpu.memory_space<vmem>>, vector<32x1xf32>
    %cst_18 = arith.constant 0.000000e+00 : f32
    %30 = vector.broadcast %cst_18 : f32 to vector<32x256xf32>
    %31 = arith.select %28, %5, %30 : vector<32x256xi1>, vector<32x256xf32>
    %cst_19 = arith.constant dense<0.000000e+00> : vector<32xf32>
    %32 = vector.multi_reduction <add>, %31, %cst_19 [1] : vector<32x256xf32> to vector<32xf32>
    %33 = vector.shape_cast %32 : vector<32xf32> to vector<32x1xf32>
    %34 = arith.addf %29, %33 : vector<32x1xf32>
    %c0_20 = arith.constant 0 : index
    %c0_21 = arith.constant 0 : index
    %35 = vector.load %arg9[%c0_20, %c0_21] : memref<32x1xf32, #tpu.memory_space<vmem>>, vector<32x1xf32>
    tpu.vector_store %arg9[%c0_20, %c0_21], %34 {strides = array<i32>} : memref<32x1xf32, #tpu.memory_space<vmem>>, vector<32x1xf32>,
    %c0_22 = arith.constant 0 : index
    %c0_23 = arith.constant 0 : index
    %36 = vector.load %arg10[%c0_22, %c0_23] : memref<32x1xf32, #tpu.memory_space<vmem>>, vector<32x1xf32>
    %cst_24 = arith.constant dense<0.000000e+00> : vector<32xf32>
    %37 = vector.multi_reduction <add>, %5, %cst_24 [1] : vector<32x256xf32> to vector<32xf32>
    %38 = vector.shape_cast %37 : vector<32xf32> to vector<32x1xf32>
    %39 = arith.addf %36, %38 : vector<32x1xf32>
    %c0_25 = arith.constant 0 : index
    %c0_26 = arith.constant 0 : index
    %40 = vector.load %arg10[%c0_25, %c0_26] : memref<32x1xf32, #tpu.memory_space<vmem>>, vector<32x1xf32>
    tpu.vector_store %arg10[%c0_25, %c0_26], %39 {strides = array<i32>} : memref<32x1xf32, #tpu.memory_space<vmem>>, vector<32x1xf32>,
    %c0_i32_27 = arith.constant 0 : i32
    %41 = arith.cmpi eq, %arg1, %c0_i32_27 : i32
    %42 = arith.extui %41 : i1 to i32
    %c0_i32_28 = arith.constant 0 : i32
    %43 = arith.cmpi ne, %42, %c0_i32_28 : i32
    scf.if %43 {
      %c0_29 = arith.constant 0 : index
      %c0_30 = arith.constant 0 : index
      %44 = vector.load %arg7[%c0_29, %c0_30] : memref<32x1xf32, #tpu.memory_space<vmem>>, vector<32x1xf32>
      %c0_31 = arith.constant 0 : index
      %c0_32 = arith.constant 0 : index
      %45 = vector.load %arg8[%c0_31, %c0_32] : memref<32x1xf32, #tpu.memory_space<vmem>>, vector<32x1xf32>
      %46 = math.log %45 : vector<32x1xf32>
      %47 = arith.addf %44, %46 : vector<32x1xf32>
      %c0_33 = arith.constant 0 : index
      %c0_34 = arith.constant 0 : index
      %48 = vector.load %arg9[%c0_33, %c0_34] : memref<32x1xf32, #tpu.memory_space<vmem>>, vector<32x1xf32>
      %49 = arith.subf %48, %47 : vector<32x1xf32>
      %c0_35 = arith.constant 0 : index
      %c0_36 = arith.constant 0 : index
      %50 = vector.load %arg5[%c0_35, %c0_36] : memref<32x1xf32, #tpu.memory_space<vmem>>, vector<32x1xf32>
      tpu.vector_store %arg5[%c0_35, %c0_36], %49 {strides = array<i32>} : memref<32x1xf32, #tpu.memory_space<vmem>>, vector<32x1xf32>,
      %c0_37 = arith.constant 0 : index
      %c0_38 = arith.constant 0 : index
      %51 = vector.load %arg10[%c0_37, %c0_38] : memref<32x1xf32, #tpu.memory_space<vmem>>, vector<32x1xf32>
      %c0_39 = arith.constant 0 : index
      %c0_40 = arith.constant 0 : index
      %52 = vector.load %arg6[%c0_39, %c0_40] : memref<32x1xf32, #tpu.memory_space<vmem>>, vector<32x1xf32>
      tpu.vector_store %arg6[%c0_39, %c0_40], %51 {strides = array<i32>} : memref<32x1xf32, #tpu.memory_space<vmem>>, vector<32x1xf32>,
    } else {
    }
    return
  }
  func.func @transform_0(%arg0: i32, %arg1: i32) -> (i32, i32) {
    %c0_i32 = arith.constant 0 : i32
    %c0_i32_0 = arith.constant 0 : i32
    return %arg0, %c0_i32 : i32, i32
  }
  func.func @transform_1(%arg0: i32, %arg1: i32) -> (i32, i32) {
    %c0_i32 = arith.constant 0 : i32
    %c0_i32_0 = arith.constant 0 : i32
    return %arg0, %c0_i32 : i32, i32
  }
  func.func @transform_2(%arg0: i32, %arg1: i32) -> (i32, i32) {
    %c0_i32 = arith.constant 0 : i32
    %c0_i32_0 = arith.constant 0 : i32
    return %arg1, %c0_i32 : i32, i32
  }
  func.func @transform_3(%arg0: i32, %arg1: i32) -> (i32, i32) {
    %c0_i32 = arith.constant 0 : i32
    %c0_i32_0 = arith.constant 0 : i32
    return %arg0, %c0_i32 : i32, i32
  }
  func.func @transform_4(%arg0: i32, %arg1: i32) -> (i32, i32) {
    %c0_i32 = arith.constant 0 : i32
    %c0_i32_0 = arith.constant 0 : i32
    return %arg0, %c0_i32 : i32, i32
  }
}

</mosaic_0001>

<llo_original>
// kernel: tpu_custom_call.1
$region0: #{tpu_custom_call.1}
  #allocation0 [shape = 'u32[]', space=smem, size = 0x4, offset = 0x4, fixed_abs, tag = 'smem constant byte address 0x4 - core index']
  #allocation1 [shape = 'u32[144,128]{1,0:T(1,128)}', space=vmem, size = 0x12000, scoped, tag = 'internal scratch']
  #allocation2 [shape = 'f32[32,1]{1,0:T(8,128)}', space=vmem, size = 0x4000, scoped, tag = 'scratch operand']
  #allocation3 [shape = 'f32[32,1]{1,0:T(8,128)}', space=vmem, size = 0x4000, scoped, tag = 'scratch operand']
  #allocation4 [shape = 'f32[32,1]{1,0:T(8,128)}', space=vmem, size = 0x4000, scoped, tag = 'scratch operand']
  #allocation5 [shape = 'f32[32,1]{1,0:T(8,128)}', space=vmem, size = 0x4000, scoped, tag = 'scratch operand']
  %s0 = inlined_call_operand.vmem [shape: s32[32,1], index: 0, kind: input, shape index: {}]
  %s1 = inlined_call_operand.vmem [shape: f32[32,32], index: 1, kind: input, shape index: {}]
  %s2 = inlined_call_operand.vmem [shape: f32[256,32], index: 2, kind: input, shape index: {}]
  %s3 = inlined_call_operand.vmem [shape: f32[32,1], index: 3, kind: output, shape index: {0}]
  %s4 = inlined_call_operand.vmem [shape: f32[32,1], index: 4, kind: output, shape index: {1}]
  %5 = xla_tuple %s3, %s4
  %s6 = sld [smem:[#allocation0]]
  $region38: #{tpu_custom_call.1} parent=0
    _
  %s8 = ssub.s32 1, %s6
  %s9 = scalar_select 0, %s8, %s6
  // Predicated region
  $region2: #{tpu_custom_call.1} parent=0 // pred_check
    _
  $region3: #{tpu_custom_call.1} parent=0 // pred_check_branch
    %11 = sbr.rel (0) target = $region5
  $region4: #{tpu_custom_call.1} parent=0 // pred_region
    _
  $region5: #{tpu_custom_call.1} parent=0 // pred_fallthru
    _
  // Predicated region
  $region6: #{tpu_custom_call.1} parent=0 // pred_check
    _
  $region7: #{tpu_custom_call.1} parent=0 // pred_check_branch
    %13 = sbr.rel (0) target = $region9
  $region8: #{tpu_custom_call.1} parent=0 // pred_region
    _
  $region9: #{tpu_custom_call.1} parent=0 // pred_fallthru
    _
  // Predicated region
  $region10: #{tpu_custom_call.1} parent=0 // pred_check
    _
  $region11: #{tpu_custom_call.1} parent=0 // pred_check_branch
    %15 = sbr.rel (0) target = $region13
  $region12: #{tpu_custom_call.1} parent=0 // pred_region
    _
  $region13: #{tpu_custom_call.1} parent=0 // pred_fallthru
    _
  %p16 = scmp.eq.s32.totalorder 0, 0
  // Predicated region
  $region14: #{tpu_custom_call.1} parent=0 // pred_check
    %p17 = pneg %p16
  $region15: #{tpu_custom_call.1} parent=0 // pred_check_branch
    %19 = sbr.rel (%p17) target = $region17
  $region16: #{tpu_custom_call.1} parent=0 // pred_region
    %vm20 = vcmask 7168
    %21 = vst.msk [vmem:[#allocation2] sm:$0xff] %vm20, -inf
    %22 = vst.msk [vmem:[#allocation2 + $0x8] sm:$0xff] %vm20, -inf
    %23 = vst.msk [vmem:[#allocation2 + $0x10] sm:$0xff] %vm20, -inf
    %24 = vst.msk [vmem:[#allocation2 + $0x18] sm:$0xff] %vm20, -inf
    %25 = vst.msk [vmem:[#allocation3] sm:$0xff] %vm20, 0.0
    %26 = vst.msk [vmem:[#allocation3 + $0x8] sm:$0xff] %vm20, 0.0
    %27 = vst.msk [vmem:[#allocation3 + $0x10] sm:$0xff] %vm20, 0.0
    %28 = vst.msk [vmem:[#allocation3 + $0x18] sm:$0xff] %vm20, 0.0
    %29 = vst.msk [vmem:[#allocation4] sm:$0xff] %vm20, 0.0
    %30 = vst.msk [vmem:[#allocation4 + $0x8] sm:$0xff] %vm20, 0.0
    %31 = vst.msk [vmem:[#allocation4 + $0x10] sm:$0xff] %vm20, 0.0
    %32 = vst.msk [vmem:[#allocation4 + $0x18] sm:$0xff] %vm20, 0.0
    %33 = vst.msk [vmem:[#allocation5] sm:$0xff] %vm20, 0.0
    %34 = vst.msk [vmem:[#allocation5 + $0x8] sm:$0xff] %vm20, 0.0
    %35 = vst.msk [vmem:[#allocation5 + $0x10] sm:$0xff] %vm20, 0.0
    %36 = vst.msk [vmem:[#allocation5 + $0x18] sm:$0xff] %vm20, 0.0
  $region17: #{tpu_custom_call.1} parent=0 // pred_fallthru
    _
  %v37 = vld [vmem:[%s1] sm:$0xff]
  %v38 = vld [vmem:[%s1 + $0x8] sm:$0xff]
  %v39 = vld [vmem:[%s1 + $0x10] sm:$0xff]
  %v40 = vld [vmem:[%s1 + $0x18] sm:$0xff]
  %v41 = vld [vmem:[%s2] sm:$0xff]
  %v42 = vld [vmem:[%s2 + $0x8] sm:$0xff]
  %v43 = vld [vmem:[%s2 + $0x10] sm:$0xff]
  %v44 = vld [vmem:[%s2 + $0x18] sm:$0xff]
  %v45 = vld [vmem:[%s2 + $0x20] sm:$0xff]
  %v46 = vld [vmem:[%s2 + $0x28] sm:$0xff]
  %v47 = vld [vmem:[%s2 + $0x30] sm:$0xff]
  %v48 = vld [vmem:[%s2 + $0x38] sm:$0xff]
  %v49 = vld [vmem:[%s2 + $0x40] sm:$0xff]
  %v50 = vld [vmem:[%s2 + $0x48] sm:$0xff]
  %v51 = vld [vmem:[%s2 + $0x50] sm:$0xff]
  %v52 = vld [vmem:[%s2 + $0x58] sm:$0xff]
  %v53 = vld [vmem:[%s2 + $0x60] sm:$0xff]
  %v54 = vld [vmem:[%s2 + $0x68] sm:$0xff]
  %v55 = vld [vmem:[%s2 + $0x70] sm:$0xff]
  %v56 = vld [vmem:[%s2 + $0x78] sm:$0xff]
  %v57 = vld [vmem:[%s2 + $0x80] sm:$0xff]
  %v58 = vld [vmem:[%s2 + $0x88] sm:$0xff]
  %v59 = vld [vmem:[%s2 + $0x90] sm:$0xff]
  %v60 = vld [vmem:[%s2 + $0x98] sm:$0xff]
  %v61 = vld [vmem:[%s2 + $0xa0] sm:$0xff]
  %v62 = vld [vmem:[%s2 + $0xa8] sm:$0xff]
  %v63 = vld [vmem:[%s2 + $0xb0] sm:$0xff]
  %v64 = vld [vmem:[%s2 + $0xb8] sm:$0xff]
  %v65 = vld [vmem:[%s2 + $0xc0] sm:$0xff]
  %v66 = vld [vmem:[%s2 + $0xc8] sm:$0xff]
  %v67 = vld [vmem:[%s2 + $0xd0] sm:$0xff]
  %v68 = vld [vmem:[%s2 + $0xd8] sm:$0xff]
  %v69 = vld [vmem:[%s2 + $0xe0] sm:$0xff]
  %v70 = vld [vmem:[%s2 + $0xe8] sm:$0xff]
  %v71 = vld [vmem:[%s2 + $0xf0] sm:$0xff]
  %v72 = vld [vmem:[%s2 + $0xf8] sm:$0xff]
  %vm73 = vcmask 261120
  %v75 = vsel %vm73, %v37, 0
  %v78 = vsel %vm73, %v38, 0
  %v81 = vsel %vm73, %v39, 0
  %v84 = vsel %vm73, %v40, 0
  %v87 = vsel %vm73, %v41, 0
  %v90 = vsel %vm73, %v42, 0
  %v93 = vsel %vm73, %v43, 0
  %v96 = vsel %vm73, %v44, 0
  %v99 = vsel %vm73, %v45, 0
  %v102 = vsel %vm73, %v46, 0
  %v105 = vsel %vm73, %v47, 0
  %v108 = vsel %vm73, %v48, 0
  %v111 = vsel %vm73, %v49, 0
  %v114 = vsel %vm73, %v50, 0
  %v117 = vsel %vm73, %v51, 0
  %v120 = vsel %vm73, %v52, 0
  %v123 = vsel %vm73, %v53, 0
  %v126 = vsel %vm73, %v54, 0
  %v129 = vsel %vm73, %v55, 0
  %v132 = vsel %vm73, %v56, 0
  %v135 = vsel %vm73, %v57, 0
  %v138 = vsel %vm73, %v58, 0
  %v141 = vsel %vm73, %v59, 0
  %v144 = vsel %vm73, %v60, 0
  %v147 = vsel %vm73, %v61, 0
  %v150 = vsel %vm73, %v62, 0
  %v153 = vsel %vm73, %v63, 0
  %v156 = vsel %vm73, %v64, 0
  %v159 = vsel %vm73, %v65, 0
  %v162 = vsel %vm73, %v66, 0
  %v165 = vsel %vm73, %v67, 0
  %v168 = vsel %vm73, %v68, 0
  %v171 = vsel %vm73, %v69, 0
  %v174 = vsel %vm73, %v70, 0
  %v177 = vsel %vm73, %v71, 0
  %v180 = vsel %vm73, %v72, 0
  %182 = vmatprep.subr.mxu0 0.0
  %183 = vmatpush1.xpose.msra.mxu0 %v87
  %184 = vmatprep.subr.mxu0 0.0
  %185 = vmatpush1.xpose.msra.mxu0 %v90
  %186 = vmatprep.subr.mxu0 0.0
  %187 = vmatpush1.xpose.msra.mxu0 %v93
  %188 = vmatprep.subr.mxu0 0.0
  %189 = vmatpush1.xpose.msra.mxu0 %v96
  %190 = vmatprep.subr.mxu0 0.0
  %191 = vmatpush1.xpose.msra.mxu0 %v99
  %192 = vmatprep.subr.mxu0 0.0
  %193 = vmatpush1.xpose.msra.mxu0 %v102
  %194 = vmatprep.subr.mxu0 0.0
  %195 = vmatpush1.xpose.msra.mxu0 %v105
  %196 = vmatprep.subr.mxu0 0.0
  %197 = vmatpush1.xpose.msra.mxu0 %v108
  %198 = vmatprep.subr.mxu0 0.0
  %199 = vmatpush1.xpose.msra.mxu0 %v111
  %200 = vmatprep.subr.mxu0 0.0
  %201 = vmatpush1.xpose.msra.mxu0 %v114
  %202 = vmatprep.subr.mxu0 0.0
  %203 = vmatpush1.xpose.msra.mxu0 %v117
  %204 = vmatprep.subr.mxu0 0.0
  %205 = vmatpush1.xpose.msra.mxu0 %v120
  %206 = vmatprep.subr.mxu0 0.0
  %207 = vmatpush1.xpose.msra.mxu0 %v123
  %208 = vmatprep.subr.mxu0 0.0
  %209 = vmatpush1.xpose.msra.mxu0 %v126
  %210 = vmatprep.subr.mxu0 0.0
  %211 = vmatpush1.xpose.msra.mxu0 %v129
  %212 = vmatprep.subr.mxu0 0.0
  %213 = vmatpush1.xpose.msra.mxu0 %v132
  %214 = vmatprep.subr.mxu0 0.0
  %215 = vmatpush1.xpose.msra.mxu0 %v135
  %216 = vmatprep.subr.mxu0 0.0
  %217 = vmatpush1.xpose.msra.mxu0 %v138
  %218 = vmatprep.subr.mxu0 0.0
  %219 = vmatpush1.xpose.msra.mxu0 %v141
  %220 = vmatprep.subr.mxu0 0.0
  %221 = vmatpush1.xpose.msra.mxu0 %v144
  %222 = vmatprep.subr.mxu0 0.0
  %223 = vmatpush1.xpose.msra.mxu0 %v147
  %224 = vmatprep.subr.mxu0 0.0
  %225 = vmatpush1.xpose.msra.mxu0 %v150
  %226 = vmatprep.subr.mxu0 0.0
  %227 = vmatpush1.xpose.msra.mxu0 %v153
  %228 = vmatprep.subr.mxu0 0.0
  %229 = vmatpush1.xpose.msra.mxu0 %v156
  %230 = vmatprep.subr.mxu0 0.0
  %231 = vmatpush1.xpose.msra.mxu0 %v159
  %232 = vmatprep.subr.mxu0 0.0
  %233 = vmatpush1.xpose.msra.mxu0 %v162
  %234 = vmatprep.subr.mxu0 0.0
  %235 = vmatpush1.xpose.msra.mxu0 %v165
  %236 = vmatprep.subr.mxu0 0.0
  %237 = vmatpush1.xpose.msra.mxu0 %v168
  %238 = vmatprep.subr.mxu0 0.0
  %239 = vmatpush1.xpose.msra.mxu0 %v171
  %240 = vmatprep.subr.mxu0 0.0
  %241 = vmatpush1.xpose.msra.mxu0 %v174
  %242 = vmatprep.subr.mxu0 0.0
  %243 = vmatpush1.xpose.msra.mxu0 %v177
  %244 = vmatprep.subr.mxu0 0.0
  %245 = vmatpush1.xpose.msra.mxu0 %v180
  %246 = vmatprep.mubr.f32.mxu0 0.0
  %247 = vmatmul.mubr.f32.gmra.mrb[0].mxu0 %v75
  %v248 = vpop.f32.mrb[0].mxu0
  %v249 = vadd.f32 0.0, %v248
  %v250 = vpop.f32.mrb[0].mxu0
  %v251 = vadd.f32 0.0, %v250
  %252 = vmatprep.mubr.f32.mxu0 0.0
  %253 = vmatmul.mubr.f32.gmra.mrb[0].mxu0 %v78
  %v254 = vpop.f32.mrb[0].mxu0
  %v255 = vadd.f32 0.0, %v254
  %v256 = vpop.f32.mrb[0].mxu0
  %v257 = vadd.f32 0.0, %v256
  %258 = vmatprep.mubr.f32.mxu0 0.0
  %259 = vmatmul.mubr.f32.gmra.mrb[0].mxu0 %v81
  %v260 = vpop.f32.mrb[0].mxu0
  %v261 = vadd.f32 0.0, %v260
  %v262 = vpop.f32.mrb[0].mxu0
  %v263 = vadd.f32 0.0, %v262
  %264 = vmatprep.mubr.f32.mxu0 0.0
  %265 = vmatmul.mubr.f32.gmra.mrb[0].mxu0 %v84
  %v266 = vpop.f32.mrb[0].mxu0
  %v267 = vadd.f32 0.0, %v266
  %v268 = vpop.f32.mrb[0].mxu0
  %v269 = vadd.f32 0.0, %v268
  %270 = vdwg.mxu0
  %v271 = vld [vmem:[#allocation2] sm:$0xff]
  %v272 = vld [vmem:[#allocation2 + $0x8] sm:$0xff]
  %v273 = vld [vmem:[#allocation2 + $0x10] sm:$0xff]
  %v274 = vld [vmem:[#allocation2 + $0x18] sm:$0xff]
  %v275 = vmax.f32 %v249, %v251
  %276 = vmax.xlane.f32.xlu0 %v275
  %v277 = vpop.xlane.xlu0 %276
  %v278 = vmax.f32 %v255, %v257
  %279 = vmax.xlane.f32.xlu0 %v278
  %v280 = vpop.xlane.xlu0 %279
  %v281 = vmax.f32 %v261, %v263
  %282 = vmax.xlane.f32.xlu0 %v281
  %v283 = vpop.xlane.xlu0 %282
  %v284 = vmax.f32 %v267, %v269
  %285 = vmax.xlane.f32.xlu0 %v284
  %v286 = vpop.xlane.xlu0 %285
  %v287 = vmax.f32 %v271, %v277
  %v288 = vmax.f32 %v272, %v280
  %v289 = vmax.f32 %v273, %v283
  %v290 = vmax.f32 %v274, %v286
  %v291 = vld [vmem:[#allocation3] sm:$0xff]
  %v292 = vld [vmem:[#allocation3 + $0x8] sm:$0xff]
  %v293 = vld [vmem:[#allocation3 + $0x10] sm:$0xff]
  %v294 = vld [vmem:[#allocation3 + $0x18] sm:$0xff]
  %v295 = vsub.f32 %v271, %v287
  %v296 = vsub.f32 %v272, %v288
  %v297 = vsub.f32 %v273, %v289
  %v298 = vsub.f32 %v274, %v290
  %v299 = vmul.f32 %v295, 1.442695
  %v300 = vpow.pop %v299
  %v301 = vmul.f32 %v296, 1.442695
  %v302 = vpow.pop %v301
  %v303 = vmul.f32 %v297, 1.442695
  %v304 = vpow.pop %v303
  %v305 = vmul.f32 %v298, 1.442695
  %v306 = vpow.pop %v305
  %v307 = vmul.f32 %v291, %v300
  %v308 = vmul.f32 %v292, %v302
  %v309 = vmul.f32 %v293, %v304
  %v310 = vmul.f32 %v294, %v306
  %312 = vset.pattern.permute.xlu0 0
  %313 = vperm.xlu0 %312, %v287
  %v314 = vpop.permute.xlu0 %313
  %317 = vset.pattern.permute.xlu0 0
  %318 = vperm.xlu0 %317, %v288
  %v319 = vpop.permute.xlu0 %318
  %322 = vset.pattern.permute.xlu0 0
  %323 = vperm.xlu0 %322, %v289
  %v324 = vpop.permute.xlu0 %323
  %327 = vset.pattern.permute.xlu0 0
  %328 = vperm.xlu0 %327, %v290
  %v329 = vpop.permute.xlu0 %328
  %v331 = vsub.f32 %v249, %v314
  %v332 = vsub.f32 %v251, %v314
  %v333 = vsub.f32 %v255, %v319
  %v334 = vsub.f32 %v257, %v319
  %v335 = vsub.f32 %v261, %v324
  %v336 = vsub.f32 %v263, %v324
  %v337 = vsub.f32 %v267, %v329
  %v338 = vsub.f32 %v269, %v329
  %v339 = vmul.f32 %v331, 1.442695
  %v340 = vpow.pop %v339
  %v341 = vmul.f32 %v332, 1.442695
  %v342 = vpow.pop %v341
  %v343 = vmul.f32 %v333, 1.442695
  %v344 = vpow.pop %v343
  %v345 = vmul.f32 %v334, 1.442695
  %v346 = vpow.pop %v345
  %v347 = vmul.f32 %v335, 1.442695
  %v348 = vpow.pop %v347
  %v349 = vmul.f32 %v336, 1.442695
  %v350 = vpow.pop %v349
  %v351 = vmul.f32 %v337, 1.442695
  %v352 = vpow.pop %v351
  %v353 = vmul.f32 %v338, 1.442695
  %v354 = vpow.pop %v353
  %v355 = vadd.f32 %v340, %v342
  %356 = vadd.xlane.f32.xlu0 %v355
  %v357 = vpop.xlane.xlu0 %356
  %v358 = vadd.f32 %v344, %v346
  %359 = vadd.xlane.f32.xlu0 %v358
  %v360 = vpop.xlane.xlu0 %359
  %v361 = vadd.f32 %v348, %v350
  %362 = vadd.xlane.f32.xlu0 %v361
  %v363 = vpop.xlane.xlu0 %362
  %v364 = vadd.f32 %v352, %v354
  %365 = vadd.xlane.f32.xlu0 %v364
  %v366 = vpop.xlane.xlu0 %365
  %v367 = vadd.f32 %v307, %v357
  %v368 = vadd.f32 %v308, %v360
  %v369 = vadd.f32 %v309, %v363
  %v370 = vadd.f32 %v310, %v366
  %vm371 = vcmask 7168
  %372 = vst.msk [vmem:[#allocation3] sm:$0xff] %vm371, %v367
  %373 = vst.msk [vmem:[#allocation3 + $0x8] sm:$0xff] %vm371, %v368
  %374 = vst.msk [vmem:[#allocation3 + $0x10] sm:$0xff] %vm371, %v369
  %375 = vst.msk [vmem:[#allocation3 + $0x18] sm:$0xff] %vm371, %v370
  %376 = vst.msk [vmem:[#allocation2] sm:$0xff] %vm371, %v287
  %377 = vst.msk [vmem:[#allocation2 + $0x8] sm:$0xff] %vm371, %v288
  %378 = vst.msk [vmem:[#allocation2 + $0x10] sm:$0xff] %vm371, %v289
  %379 = vst.msk [vmem:[#allocation2 + $0x18] sm:$0xff] %vm371, %v290
  %v380 = vlaneseq
  %v381 = vand.u32 %v380, 127
  %v382 = vadd.s32 %v381, 128
  %s383 = smul.u32 0, 256
  %v384 = vstv %s383
  %v385 = vadd.s32 %v381, %v384
  %v386 = vadd.s32 %v382, %v384
  %v387 = vld [vmem:[%s0] sm:$0xff]
  %v388 = vld [vmem:[%s0 + $0x8] sm:$0xff]
  %v389 = vld [vmem:[%s0 + $0x10] sm:$0xff]
  %v390 = vld [vmem:[%s0 + $0x18] sm:$0xff]
  %391 = vset.pattern.permute.xlu0 0
  %392 = vperm.xlu0 %391, %v387
  %v393 = vpop.permute.xlu0 %392
  %394 = vset.pattern.permute.xlu0 0
  %395 = vperm.xlu0 %394, %v388
  %v396 = vpop.permute.xlu0 %395
  %397 = vset.pattern.permute.xlu0 0
  %398 = vperm.xlu0 %397, %v389
  %v399 = vpop.permute.xlu0 %398
  %400 = vset.pattern.permute.xlu0 0
  %401 = vperm.xlu0 %400, %v390
  %v402 = vpop.permute.xlu0 %401
  %vm403 = vcmp.eq.s32.totalorder %v385, %v393
  %vm404 = vcmp.eq.s32.totalorder %v386, %v393
  %vm405 = vcmp.eq.s32.totalorder %v385, %v396
  %vm406 = vcmp.eq.s32.totalorder %v386, %v396
  %vm407 = vcmp.eq.s32.totalorder %v385, %v399
  %vm408 = vcmp.eq.s32.totalorder %v386, %v399
  %vm409 = vcmp.eq.s32.totalorder %v385, %v402
  %vm410 = vcmp.eq.s32.totalorder %v386, %v402
  %v411 = vld [vmem:[#allocation4] sm:$0xff]
  %v412 = vld [vmem:[#allocation4 + $0x8] sm:$0xff]
  %v413 = vld [vmem:[#allocation4 + $0x10] sm:$0xff]
  %v414 = vld [vmem:[#allocation4 + $0x18] sm:$0xff]
  %v415 = vsel %vm403, %v249, 0.0
  %v416 = vsel %vm404, %v251, 0.0
  %v417 = vsel %vm405, %v255, 0.0
  %v418 = vsel %vm406, %v257, 0.0
  %v419 = vsel %vm407, %v261, 0.0
  %v420 = vsel %vm408, %v263, 0.0
  %v421 = vsel %vm409, %v267, 0.0
  %v422 = vsel %vm410, %v269, 0.0
  %v423 = vadd.f32 %v415, %v416
  %424 = vadd.xlane.f32.xlu0 %v423
  %v425 = vpop.xlane.xlu0 %424
  %v426 = vadd.f32 %v417, %v418
  %427 = vadd.xlane.f32.xlu0 %v426
  %v428 = vpop.xlane.xlu0 %427
  %v429 = vadd.f32 %v419, %v420
  %430 = vadd.xlane.f32.xlu0 %v429
  %v431 = vpop.xlane.xlu0 %430
  %v432 = vadd.f32 %v421, %v422
  %433 = vadd.xlane.f32.xlu0 %v432
  %v434 = vpop.xlane.xlu0 %433
  %v435 = vadd.f32 %v411, %v425
  %v436 = vadd.f32 %v412, %v428
  %v437 = vadd.f32 %v413, %v431
  %v438 = vadd.f32 %v414, %v434
  %439 = vst.msk [vmem:[#allocation4] sm:$0xff] %vm371, %v435
  %440 = vst.msk [vmem:[#allocation4 + $0x8] sm:$0xff] %vm371, %v436
  %441 = vst.msk [vmem:[#allocation4 + $0x10] sm:$0xff] %vm371, %v437
  %442 = vst.msk [vmem:[#allocation4 + $0x18] sm:$0xff] %vm371, %v438
  %v443 = vld [vmem:[#allocation5] sm:$0xff]
  %v444 = vld [vmem:[#allocation5 + $0x8] sm:$0xff]
  %v445 = vld [vmem:[#allocation5 + $0x10] sm:$0xff]
  %v446 = vld [vmem:[#allocation5 + $0x18] sm:$0xff]
  %v447 = vadd.f32 %v249, %v251
  %448 = vadd.xlane.f32.xlu0 %v447
  %v449 = vpop.xlane.xlu0 %448
  %v450 = vadd.f32 %v255, %v257
  %451 = vadd.xlane.f32.xlu0 %v450
  %v452 = vpop.xlane.xlu0 %451
  %v453 = vadd.f32 %v261, %v263
  %454 = vadd.xlane.f32.xlu0 %v453
  %v455 = vpop.xlane.xlu0 %454
  %v456 = vadd.f32 %v267, %v269
  %457 = vadd.xlane.f32.xlu0 %v456
  %v458 = vpop.xlane.xlu0 %457
  %v459 = vadd.f32 %v443, %v449
  %v460 = vadd.f32 %v444, %v452
  %v461 = vadd.f32 %v445, %v455
  %v462 = vadd.f32 %v446, %v458
  %463 = vst.msk [vmem:[#allocation5] sm:$0xff] %vm371, %v459
  %464 = vst.msk [vmem:[#allocation5 + $0x8] sm:$0xff] %vm371, %v460
  %465 = vst.msk [vmem:[#allocation5 + $0x10] sm:$0xff] %vm371, %v461
  %466 = vst.msk [vmem:[#allocation5 + $0x18] sm:$0xff] %vm371, %v462
  // Predicated region
  $region18: #{tpu_custom_call.1} parent=0 // pred_check
    %p467 = pneg %p16
  $region19: #{tpu_custom_call.1} parent=0 // pred_check_branch
    %469 = sbr.rel (%p467) target = $region21
  $region20: #{tpu_custom_call.1} parent=0 // pred_region
    %v470 = vld [vmem:[#allocation2] sm:$0xff]
    %v471 = vld [vmem:[#allocation2 + $0x8] sm:$0xff]
    %v472 = vld [vmem:[#allocation2 + $0x10] sm:$0xff]
    %v473 = vld [vmem:[#allocation2 + $0x18] sm:$0xff]
    %v474 = vld [vmem:[#allocation3] sm:$0xff]
    %v475 = vld [vmem:[#allocation3 + $0x8] sm:$0xff]
    %v476 = vld [vmem:[#allocation3 + $0x10] sm:$0xff]
    %v477 = vld [vmem:[#allocation3 + $0x18] sm:$0xff]
    %v478 = vlog2.pop %v474
    %v479 = vmul.f32 %v478, 0.6931472
    %v480 = vlog2.pop %v475
    %v481 = vmul.f32 %v480, 0.6931472
    %v482 = vlog2.pop %v476
    %v483 = vmul.f32 %v482, 0.6931472
    %v484 = vlog2.pop %v477
    %v485 = vmul.f32 %v484, 0.6931472
    %v486 = vadd.f32 %v470, %v479
    %v487 = vadd.f32 %v471, %v481
    %v488 = vadd.f32 %v472, %v483
    %v489 = vadd.f32 %v473, %v485
    %v490 = vld [vmem:[#allocation4] sm:$0xff]
    %v491 = vld [vmem:[#allocation4 + $0x8] sm:$0xff]
    %v492 = vld [vmem:[#allocation4 + $0x10] sm:$0xff]
    %v493 = vld [vmem:[#allocation4 + $0x18] sm:$0xff]
    %v494 = vsub.f32 %v490, %v486
    %v495 = vsub.f32 %v491, %v487
    %v496 = vsub.f32 %v492, %v488
    %v497 = vsub.f32 %v493, %v489
    %498 = vst.msk [vmem:[%s3] sm:$0xff] %vm371, %v494
    %499 = vst.msk [vmem:[%s3 + $0x8] sm:$0xff] %vm371, %v495
    %500 = vst.msk [vmem:[%s3 + $0x10] sm:$0xff] %vm371, %v496
    %501 = vst.msk [vmem:[%s3 + $0x18] sm:$0xff] %vm371, %v497
    %v502 = vld [vmem:[#allocation5] sm:$0xff]
    %v503 = vld [vmem:[#allocation5 + $0x8] sm:$0xff]
    %v504 = vld [vmem:[#allocation5 + $0x10] sm:$0xff]
    %v505 = vld [vmem:[#allocation5 + $0x18] sm:$0xff]
    %506 = vst.msk [vmem:[%s4] sm:$0xff] %vm371, %v502
    %507 = vst.msk [vmem:[%s4 + $0x8] sm:$0xff] %vm371, %v503
    %508 = vst.msk [vmem:[%s4 + $0x10] sm:$0xff] %vm371, %v504
    %509 = vst.msk [vmem:[%s4 + $0x18] sm:$0xff] %vm371, %v505
  $region21: #{tpu_custom_call.1} parent=0 // pred_fallthru
    _
  // Predicated region
  $region22: #{tpu_custom_call.1} parent=0 // pred_check
    _
  $region23: #{tpu_custom_call.1} parent=0 // pred_check_branch
    %511 = sbr.rel (0) target = $region25
  $region24: #{tpu_custom_call.1} parent=0 // pred_region
    _
  $region25: #{tpu_custom_call.1} parent=0 // pred_fallthru
    _
  // Predicated region
  $region26: #{tpu_custom_call.1} parent=0 // pred_check
    _
  $region27: #{tpu_custom_call.1} parent=0 // pred_check_branch
    %513 = sbr.rel (0) target = $region29
  $region28: #{tpu_custom_call.1} parent=0 // pred_region
    _
  $region29: #{tpu_custom_call.1} parent=0 // pred_fallthru
    _
  // Predicated region
  $region30: #{tpu_custom_call.1} parent=0 // pred_check
    _
  $region31: #{tpu_custom_call.1} parent=0 // pred_check_branch
    %515 = sbr.rel (0) target = $region33
  $region32: #{tpu_custom_call.1} parent=0 // pred_region
    _
  $region33: #{tpu_custom_call.1} parent=0 // pred_fallthru
    _
  // Predicated region
  $region34: #{tpu_custom_call.1} parent=0 // pred_check
    _
  $region35: #{tpu_custom_call.1} parent=0 // pred_check_branch
    %517 = sbr.rel (0) target = $region37
  $region36: #{tpu_custom_call.1} parent=0 // pred_region
    _
  $region37: #{tpu_custom_call.1} parent=0 // pred_fallthru
    _

</llo_original>
